<compile_context>
chip_gen: v5e
topology: v5e:2x2
jax: 0.10.0
libtpu: 0.0.40
codegen_flags: <defaults>
</compile_context>

<pallas_src>
import math

import numpy as np
import jax
import jax.numpy as jnp
from jax.experimental import pallas as pl
from jax.experimental.pallas import tpu as pltpu

NUM_POS_FEATS = 128          # per-coordinate features -> 256 total
TEMPERATURE = 10000.0
SCALE = 2.0 * math.pi
ROW_TILE = 1024              # rows per grid step (8-row aligned, ~1 MiB out/step)


def _round_up(x, m):
    return ((x + m - 1) // m) * m


def _point_pos_emb_kernel(pts_ref, tab_ref, out_ref):
    # pts_ref: [TN, 2]
    # tab_ref: [2, 128]  row 0 = inv_dim_t (= 2*pi / dim_t), row 1 = phase (0, pi/2, ...)
    # out_ref: [TN, 256] = concat(pos_y, pos_x)
    inv = tab_ref[0:1, :]                       # [1, 128]
    ph = tab_ref[1:2, :]                        # [1, 128]
    x = pts_ref[:, 0:1]                         # [TN, 1]
    y = pts_ref[:, 1:2]                         # [TN, 1]
    # cos(a) == sin(a + pi/2): one EUP sin per element instead of sin+cos+select.
    out_ref[:, 0:NUM_POS_FEATS] = jnp.sin(y * inv + ph)                    # pos_y
    out_ref[:, NUM_POS_FEATS:2 * NUM_POS_FEATS] = jnp.sin(x * inv + ph)    # pos_x


def _make_table():
    """[2,128] host-side constant: row 0 = 2*pi/dim_t, row 1 = phase."""
    i = np.arange(NUM_POS_FEATS, dtype=np.float64)
    dim_t = TEMPERATURE ** (2.0 * np.floor(i / 2.0) / NUM_POS_FEATS)
    inv_dim_t = (SCALE / dim_t).astype(np.float32)
    phase = np.where(np.arange(NUM_POS_FEATS) % 2 == 1,
                     np.float32(math.pi / 2.0), np.float32(0.0)).astype(np.float32)
    return jnp.asarray(np.stack([inv_dim_t, phase], axis=0))   # [2, 128]


def point_encoder_forward(points, query_emb_table=None, *, row_tile=ROW_TILE):
    """Pallas equivalent of PointEncoder.forward.

    points: [B, N, 2] float32 normalized point coordinates.
    query_emb_table: [100, 256] — mirrors nn.Embedding(100, 256); unused in
                     forward, exactly like the PyTorch module.
    Returns [B, N, 256]; out[b] is the per-sample embedding the PyTorch
    forward would append to its python list.
    """
    del query_emb_table  # unused in forward, exactly like the PyTorch module
    B, N, _ = points.shape
    R = B * N

    # Flatten rows and pad to an 8-aligned row-tile multiple.
    tn = min(row_tile, _round_up(R, 8))
    r_pad = _round_up(R, tn)
    pts = points.reshape(R, 2).astype(jnp.float32)
    if r_pad != R:
        pts = jnp.pad(pts, ((0, r_pad - R), (0, 0)))

    table = _make_table()

    out = pl.pallas_call(
        _point_pos_emb_kernel,
        out_shape=jax.ShapeDtypeStruct((r_pad, 2 * NUM_POS_FEATS), jnp.float32),
        grid=(r_pad // tn,),
        in_specs=[
            pl.BlockSpec((tn, 2), lambda r: (r, 0)),
            pl.BlockSpec((2, NUM_POS_FEATS), lambda r: (0, 0)),
        ],
        out_specs=pl.BlockSpec((tn, 2 * NUM_POS_FEATS), lambda r: (r, 0)),
        compiler_params=pltpu.CompilerParams(
            dimension_semantics=("parallel",)),
    )(pts, table)

    return out[:R].reshape(B, N, 2 * NUM_POS_FEATS)


def _reference_forward(points):
    """Pure-JAX reference mirroring the DETR-style calc_emb (for validation)."""
    i = jnp.arange(NUM_POS_FEATS, dtype=jnp.float32)
    dim_t = TEMPERATURE ** (2.0 * jnp.floor(i / 2.0) / NUM_POS_FEATS)
    outs = []
    for b in range(points.shape[0]):
        p = points[b]
        x = p[:, 0] * SCALE
        y = p[:, 1] * SCALE
        px = x[:, None] / dim_t[None, :]
        py = y[:, None] / dim_t[None, :]
        px = jnp.stack([jnp.sin(px[:, 0::2]), jnp.cos(px[:, 1::2])], axis=2).reshape(p.shape[0], -1)
        py = jnp.stack([jnp.sin(py[:, 0::2]), jnp.cos(py[:, 1::2])], axis=2).reshape(p.shape[0], -1)
        outs.append(jnp.concatenate([py, px], axis=1))
    return jnp.stack(outs, axis=0)


if __name__ == "__main__":
    key = jax.random.PRNGKey(0)
    k_pts, k_emb = jax.random.split(key)

    B, N = 2, 8
    # normalized point coordinates in [0, 1), shape [B, N, 2]
    points = jax.random.uniform(k_pts, (B, N, 2), dtype=jnp.float32)

    # nn.Embedding(100, 256) weight — unused in forward, kept only to mirror
    # the module's parameter set.
    query_emb_table = jax.random.normal(k_emb, (100, 256), dtype=jnp.float32)

    embeddings = point_encoder_forward(points, query_emb_table)
    embeddings = jax.block_until_ready(embeddings)

    ref = _reference_forward(points)
    assert embeddings.shape == (B, N, 256)
    assert jnp.max(jnp.abs(embeddings - ref)) < 1e-5

    print("KERNEL_OK")
</pallas_src>

<mosaic_0001>
module attributes {stable_mosaic.version = 11 : i64} {
  func.func @_point_pos_emb_kernel(%arg0: i32, %arg1: memref<16x2xf32, #tpu.memory_space<vmem>>, %arg2: memref<2x128xf32, #tpu.memory_space<vmem>>, %arg3: memref<16x256xf32, #tpu.memory_space<vmem>>) attributes {dimension_semantics = [#tpu.dimension_semantics<parallel>], iteration_bounds = array<i64: 1>, scalar_prefetch = 0 : i64, scratch_operands = 0 : i64, tpu.core_type = #tpu.core_type<tc>, window_params = [{transform_indices = @transform_0, window_bounds = array<i64: 16, 2>}, {pipeline_mode = #tpu.pipeline_mode<synchronous>, transform_indices = @transform_1, window_bounds = array<i64: 2, 128>}, {transform_indices = @transform_2, window_bounds = array<i64: 16, 256>}]} {
    %c0 = arith.constant 0 : index
    %c0_0 = arith.constant 0 : index
    %0 = vector.load %arg2[%c0, %c0_0] : memref<2x128xf32, #tpu.memory_space<vmem>>, vector<1x128xf32>
    %c1 = arith.constant 1 : index
    %c0_1 = arith.constant 0 : index
    %1 = vector.load %arg2[%c1, %c0_1] : memref<2x128xf32, #tpu.memory_space<vmem>>, vector<1x128xf32>
    %c0_2 = arith.constant 0 : index
    %c0_3 = arith.constant 0 : index
    %2 = vector.load %arg1[%c0_2, %c0_3] : memref<16x2xf32, #tpu.memory_space<vmem>>, vector<16x1xf32>
    %c0_4 = arith.constant 0 : index
    %c1_5 = arith.constant 1 : index
    %3 = vector.load %arg1[%c0_4, %c1_5] : memref<16x2xf32, #tpu.memory_space<vmem>>, vector<16x1xf32>
    %4 = vector.broadcast %3 : vector<16x1xf32> to vector<16x128xf32>
    %5 = vector.broadcast %0 : vector<1x128xf32> to vector<16x128xf32>
    %6 = arith.mulf %4, %5 : vector<16x128xf32>
    %7 = vector.broadcast %1 : vector<1x128xf32> to vector<16x128xf32>
    %8 = arith.addf %6, %7 : vector<16x128xf32>
    %9 = math.sin %8 : vector<16x128xf32>
    %c0_6 = arith.constant 0 : index
    %c0_7 = arith.constant 0 : index
    %10 = vector.load %arg3[%c0_6, %c0_7] : memref<16x256xf32, #tpu.memory_space<vmem>>, vector<16x128xf32>
    tpu.vector_store %arg3[%c0_6, %c0_7], %9 {strides = array<i32>} : memref<16x256xf32, #tpu.memory_space<vmem>>, vector<16x128xf32>,
    %11 = vector.broadcast %2 : vector<16x1xf32> to vector<16x128xf32>
    %12 = vector.broadcast %0 : vector<1x128xf32> to vector<16x128xf32>
    %13 = arith.mulf %11, %12 : vector<16x128xf32>
    %14 = vector.broadcast %1 : vector<1x128xf32> to vector<16x128xf32>
    %15 = arith.addf %13, %14 : vector<16x128xf32>
    %16 = math.sin %15 : vector<16x128xf32>
    %c0_8 = arith.constant 0 : index
    %c128 = arith.constant 128 : index
    %17 = vector.load %arg3[%c0_8, %c128] : memref<16x256xf32, #tpu.memory_space<vmem>>, vector<16x128xf32>
    tpu.vector_store %arg3[%c0_8, %c128], %16 {strides = array<i32>} : memref<16x256xf32, #tpu.memory_space<vmem>>, vector<16x128xf32>,
    return
  }
  func.func @transform_0(%arg0: i32) -> (i32, i32) {
    %c0_i32 = arith.constant 0 : i32
    %c0_i32_0 = arith.constant 0 : i32
    return %arg0, %c0_i32 : i32, i32
  }
  func.func @transform_1(%arg0: i32) -> (i32, i32) {
    %c0_i32 = arith.constant 0 : i32
    %c0_i32_0 = arith.constant 0 : i32
    %c0_i32_1 = arith.constant 0 : i32
    return %c0_i32, %c0_i32_0 : i32, i32
  }
  func.func @transform_2(%arg0: i32) -> (i32, i32) {
    %c0_i32 = arith.constant 0 : i32
    %c0_i32_0 = arith.constant 0 : i32
    return %arg0, %c0_i32 : i32, i32
  }
}

</mosaic_0001>

<llo_original>
// kernel: tpu_custom_call.1
$region0: #{tpu_custom_call.1}
  #allocation0 [shape = 'u32[]', space=smem, size = 0x4, offset = 0x4, fixed_abs, tag = 'smem constant byte address 0x4 - core index']
  #allocation1 [shape = 'u32[72,128]{1,0:T(1,128)}', space=vmem, size = 0x9000, scoped, tag = 'internal scratch']
  %s0 = inlined_call_operand.vmem [shape: f32[16,2], index: 0, kind: input, shape index: {}]
  %s1 = inlined_call_operand.vmem [shape: f32[2,128], index: 1, kind: input, shape index: {}]
  %s2 = inlined_call_operand.hbm [shape: f32[16,256], index: 2, kind: output, shape index: {}]
  %s3 = sld [smem:[#allocation0]]
  $region18: #{tpu_custom_call.1} parent=0
    _
  %s5 = ssub.s32 1, %s3
  %s6 = scalar_select 0, %s5, %s3
  $region1: #{tpu_custom_call.1} parent=0
    #allocation2 [shape = 'u8[16384]{0}', space=vmem, size = 0x4000, scoped, tag = 'output window, operand 0, single buffered']
    #allocation3 [shape = 's32[1]{0}', space=sflag, size = 0x4, scoped, tag = 'scoped memory for tpu_custom_call.1']
    %7 = vsyncpa [#allocation3], 0
    // Predicated region
    $region2: #{tpu_custom_call.1} parent=1 // pred_check
      _
    $region3: #{tpu_custom_call.1} parent=1 // pred_check_branch
      %9 = sbr.rel (0) target = $region5
    $region4: #{tpu_custom_call.1} parent=1 // pred_region
      _
    $region5: #{tpu_custom_call.1} parent=1 // pred_fallthru
      _
    // Predicated region
    $region6: #{tpu_custom_call.1} parent=1 // pred_check
      _
    $region7: #{tpu_custom_call.1} parent=1 // pred_check_branch
      %11 = sbr.rel (0) target = $region9
    $region8: #{tpu_custom_call.1} parent=1 // pred_region
      _
    $region9: #{tpu_custom_call.1} parent=1 // pred_fallthru
      _
    %v12 = vld [vmem:[%s1] sm:$0x1]
    %v13 = vld [vmem:[%s1 + $0x1] sm:$0x1]
    %v14 = vld [vmem:[%s0] sm:$0xff]
    %v15 = vld [vmem:[%s0 + $0x8] sm:$0xff]
    %17 = vset.pattern.permute.xlu0 1
    %18 = vperm.xlu0 %17, %v14
    %v19 = vpop.permute.xlu0 %18
    %22 = vset.pattern.permute.xlu0 1
    %23 = vperm.xlu0 %22, %v15
    %v24 = vpop.permute.xlu0 %23
    %v26 = vperm.slane %v12, 0
    %v27 = vmul.f32 %v19, %v26
    %v28 = vmul.f32 %v24, %v26
    %v29 = vperm.slane %v13, 0
    %v30 = vadd.f32 %v27, %v29
    %v31 = vadd.f32 %v28, %v29
    %v32 = vand.u32 2147483647, %v30
    %vm33 = vcmp.le.f32.partialorder %v32, 0.7853982
    %vm34 = vcmp.lt.s32.totalorder %v30, 0
    %v35 = vand.u32 %v30, 2139095040
    %v36 = vshrl.u32 %v35, 23
    %v37 = vsub.s32 %v36, 127
    %v38 = vand.u32 2147483647, %v30
    %v39 = vand.u32 %v38, 8388607
    %v40 = vor.u32 %v39, 8388608
    %v41 = vsub.s32 0, %v40
    %v42 = vadd.s32 %v37, 1
    %vm43 = vcmp.gt.s32.totalorder %v42, 0
    %v44 = vsel %vm43, %v42, 0
    %v45 = vshrl.u32 %v44, 5
    %v46 = vand.u32 %v44, 31
    %v47 = vsub.s32 32, %v46
    %v48 = vshrl.u32 683565275, %v47
    %v49 = vshll.u32 683565275, %v46
    %v50 = vshrl.u32 2475754826, %v47
    %v51 = vor.u32 %v49, %v50
    %v52 = vshll.u32 2475754826, %v46
    %v53 = vshrl.u32 2131351028, %v47
    %v54 = vor.u32 %v52, %v53
    %v55 = vshll.u32 2131351028, %v46
    %v56 = vshrl.u32 2102212464, %v47
    %v57 = vor.u32 %v55, %v56
    %v58 = vshll.u32 2102212464, %v46
    %v59 = vshrl.u32 920167782, %v47
    %v60 = vor.u32 %v58, %v59
    %v61 = vshll.u32 920167782, %v46
    %v62 = vshrl.u32 1326507024, %v47
    %v63 = vor.u32 %v61, %v62
    %vm64 = vcmp.lt.s32.totalorder %v45, 1
    %vm65 = vcmp.lt.s32.totalorder %v45, 2
    %vm66 = vcmp.lt.s32.totalorder %v45, 3
    %vm67 = vcmp.lt.s32.totalorder %v45, 4
    %v68 = vsel %vm64, %v48, %v51
    %v69 = vsel %vm67, %v57, 2102212464
    %v70 = vsel %vm66, %v54, %v69
    %v71 = vsel %vm65, %v68, %v70
    %v72 = vsel %vm64, %v51, %v54
    %v73 = vsel %vm67, %v60, 920167782
    %v74 = vsel %vm66, %v57, %v73
    %v75 = vsel %vm65, %v72, %v74
    %v76 = vsel %vm64, %v54, %v57
    %v77 = vsel %vm67, %v63, 1326507024
    %v78 = vsel %vm66, %v60, %v77
    %v79 = vsel %vm65, %v76, %v78
    %v80 = vshll.u32 %v40, 8
    %v81 = vand.u32 %v80, 65535
    %v82 = vshrl.u32 %v80, 16
    %v83 = vand.u32 %v79, 65535
    %v84 = vshrl.u32 %v79, 16
    %v85 = vmul.u32 %v81, %v83
    %v86 = vmul.u32 %v81, %v84
    %v87 = vmul.u32 %v82, %v83
    %v88 = vmul.u32 %v82, %v84
    %v89 = vshll.u32 %v86, 16
    %v90 = vshrl.u32 %v86, 16
    %v91 = vshll.u32 %v87, 16
    %v92 = vshrl.u32 %v87, 16
    %vm93 = vc.u32 %v85, %v89
    %v94 = vsel %vm93, 1, 0
    %v95 = vadd.s32 %v85, %v89
    %v96 = vadd.s32 %v88, %v94
    %vm97 = vc.u32 %v95, %v91
    %v98 = vsel %vm97, 1, 0
    %v99 = vadd.s32 %v95, %v91
    %v100 = vadd.s32 %v96, %v98
    %v101 = vadd.s32 %v100, %v90
    %v102 = vadd.s32 %v101, %v92
    %v103 = vand.u32 %v80, 65535
    %v104 = vshrl.u32 %v80, 16
    %v105 = vand.u32 %v75, 65535
    %v106 = vshrl.u32 %v75, 16
    %v107 = vmul.u32 %v103, %v105
    %v108 = vmul.u32 %v103, %v106
    %v109 = vmul.u32 %v104, %v105
    %v110 = vmul.u32 %v104, %v106
    %v111 = vshll.u32 %v108, 16
    %v112 = vshrl.u32 %v108, 16
    %v113 = vshll.u32 %v109, 16
    %v114 = vshrl.u32 %v109, 16
    %vm115 = vc.u32 %v107, %v111
    %v116 = vsel %vm115, 1, 0
    %v117 = vadd.s32 %v107, %v111
    %v118 = vadd.s32 %v110, %v116
    %vm119 = vc.u32 %v117, %v113
    %v120 = vsel %vm119, 1, 0
    %v121 = vadd.s32 %v117, %v113
    %v122 = vadd.s32 %v118, %v120
    %v123 = vadd.s32 %v122, %v112
    %v124 = vadd.s32 %v123, %v114
    %v125 = vmul.u32 %v80, %v71
    %v126 = vadd.s32 %v102, %v121
    %vm127 = vc.u32 %v102, %v121
    %v128 = vadd.s32 %v124, 1
    %v129 = vsel %vm127, %v128, %v124
    %v130 = vadd.s32 %v125, %v129
    %v131 = vadd.s32 %v130, 536870912
    %v132 = vshrl.u32 %v131, 30
    %v133 = vshll.u32 %v132, 30
    %v134 = vsub.s32 %v130, %v133
    %vm135 = vcmp.lt.s32.totalorder %v134, 0
    %v136 = vsub.s32 0, %v134
    %v137 = vsel %vm135, %v136, %v134
    %v138 = vclz %v137
    %v139 = vsub.s32 %v138, 2
    %vm140 = vcmp.gt.s32.totalorder 0, %v139
    %v141 = vsel %vm140, 0, %v139
    %v142 = vsub.s32 32, %v141
    %v143 = vshll.u32 %v134, %v141
    %v144 = vshrl.u32 %v126, %v142
    %v145 = vor.u32 %v143, %v144
    %v146 = vsub.s32 4294967266, %v141
    %v147 = vadd.s32 %v146, 127
    %v148 = vshll.u32 %v147, 23
    %v149 = vor.u32 4788187, %v148
    %v150 = vand.u32 2147483647, %v149
    %v152 = vcvt.s32.f32 %v145
    %v153 = vmul.f32 %v152, %v150
    %v154 = vxor.u32 %v153, 2147483648
    %v155 = vsel %vm34, %v154, %v153
    %v156 = vsub.s32 4, %v132
    %v157 = vsel %vm34, %v156, %v132
    %v158 = vsel %vm33, %v30, %v155
    %v159 = vsel %vm33, 0, %v157
    %v160 = vmul.f32 %v158, %v158
    %v161 = vmul.f32 %v160, -0.001358992
    %v162 = vadd.f32 %v161, 0.041655596
    %v163 = vmul.f32 %v160, %v162
    %v164 = vadd.f32 %v163, -0.4999988
    %v165 = vmul.f32 %v160, %v164
    %v166 = vadd.f32 1.0, %v165
    %v167 = vmul.f32 %v158, %v158
    %v168 = vmul.f32 %v167, -0.00019511016
    %v169 = vadd.f32 %v168, 0.008332121
    %v170 = vmul.f32 %v167, %v169
    %v171 = vadd.f32 %v170, -0.16666654
    %v172 = vmul.f32 %v167, %v171
    %v173 = vadd.f32 %v172, 1.0
    %v174 = vmul.f32 %v173, %v158
    %vm175 = vweird.f32 %v30
    %v176 = vadd.s32 %v159, 3
    %v177 = vand.u32 %v176, 3
    %vm178 = vcmp.lt.s32.totalorder %v177, 2
    %vm179 = vcmp.eq.s32.totalorder %v177, 0
    %v180 = vxor.u32 %v174, 2147483648
    %v181 = vsel %vm179, %v166, %v180
    %vm182 = vcmp.eq.s32.totalorder %v177, 2
    %v183 = vxor.u32 %v166, 2147483648
    %v184 = vsel %vm182, %v183, %v174
    %v185 = vsel %vm178, %v181, %v184
    %v186 = vsel %vm175, nan, %v185
    %v187 = vand.u32 2147483647, %v31
    %vm188 = vcmp.le.f32.partialorder %v187, 0.7853982
    %vm189 = vcmp.lt.s32.totalorder %v31, 0
    %v190 = vand.u32 %v31, 2139095040
    %v191 = vshrl.u32 %v190, 23
    %v192 = vsub.s32 %v191, 127
    %v193 = vand.u32 2147483647, %v31
    %v194 = vand.u32 %v193, 8388607
    %v195 = vor.u32 %v194, 8388608
    %v196 = vsub.s32 0, %v195
    %v197 = vadd.s32 %v192, 1
    %vm198 = vcmp.gt.s32.totalorder %v197, 0
    %v199 = vsel %vm198, %v197, 0
    %v200 = vshrl.u32 %v199, 5
    %v201 = vand.u32 %v199, 31
    %v202 = vsub.s32 32, %v201
    %v203 = vshrl.u32 683565275, %v202
    %v204 = vshll.u32 683565275, %v201
    %v205 = vshrl.u32 2475754826, %v202
    %v206 = vor.u32 %v204, %v205
    %v207 = vshll.u32 2475754826, %v201
    %v208 = vshrl.u32 2131351028, %v202
    %v209 = vor.u32 %v207, %v208
    %v210 = vshll.u32 2131351028, %v201
    %v211 = vshrl.u32 2102212464, %v202
    %v212 = vor.u32 %v210, %v211
    %v213 = vshll.u32 2102212464, %v201
    %v214 = vshrl.u32 920167782, %v202
    %v215 = vor.u32 %v213, %v214
    %v216 = vshll.u32 920167782, %v201
    %v217 = vshrl.u32 1326507024, %v202
    %v218 = vor.u32 %v216, %v217
    %vm219 = vcmp.lt.s32.totalorder %v200, 1
    %vm220 = vcmp.lt.s32.totalorder %v200, 2
    %vm221 = vcmp.lt.s32.totalorder %v200, 3
    %vm222 = vcmp.lt.s32.totalorder %v200, 4
    %v223 = vsel %vm219, %v203, %v206
    %v224 = vsel %vm222, %v212, 2102212464
    %v225 = vsel %vm221, %v209, %v224
    %v226 = vsel %vm220, %v223, %v225
    %v227 = vsel %vm219, %v206, %v209
    %v228 = vsel %vm222, %v215, 920167782
    %v229 = vsel %vm221, %v212, %v228
    %v230 = vsel %vm220, %v227, %v229
    %v231 = vsel %vm219, %v209, %v212
    %v232 = vsel %vm222, %v218, 1326507024
    %v233 = vsel %vm221, %v215, %v232
    %v234 = vsel %vm220, %v231, %v233
    %v235 = vshll.u32 %v195, 8
    %v236 = vand.u32 %v235, 65535
    %v237 = vshrl.u32 %v235, 16
    %v238 = vand.u32 %v234, 65535
    %v239 = vshrl.u32 %v234, 16
    %v240 = vmul.u32 %v236, %v238
    %v241 = vmul.u32 %v236, %v239
    %v242 = vmul.u32 %v237, %v238
    %v243 = vmul.u32 %v237, %v239
    %v244 = vshll.u32 %v241, 16
    %v245 = vshrl.u32 %v241, 16
    %v246 = vshll.u32 %v242, 16
    %v247 = vshrl.u32 %v242, 16
    %vm248 = vc.u32 %v240, %v244
    %v249 = vsel %vm248, 1, 0
    %v250 = vadd.s32 %v240, %v244
    %v251 = vadd.s32 %v243, %v249
    %vm252 = vc.u32 %v250, %v246
    %v253 = vsel %vm252, 1, 0
    %v254 = vadd.s32 %v250, %v246
    %v255 = vadd.s32 %v251, %v253
    %v256 = vadd.s32 %v255, %v245
    %v257 = vadd.s32 %v256, %v247
    %v258 = vand.u32 %v235, 65535
    %v259 = vshrl.u32 %v235, 16
    %v260 = vand.u32 %v230, 65535
    %v261 = vshrl.u32 %v230, 16
    %v262 = vmul.u32 %v258, %v260
    %v263 = vmul.u32 %v258, %v261
    %v264 = vmul.u32 %v259, %v260
    %v265 = vmul.u32 %v259, %v261
    %v266 = vshll.u32 %v263, 16
    %v267 = vshrl.u32 %v263, 16
    %v268 = vshll.u32 %v264, 16
    %v269 = vshrl.u32 %v264, 16
    %vm270 = vc.u32 %v262, %v266
    %v271 = vsel %vm270, 1, 0
    %v272 = vadd.s32 %v262, %v266
    %v273 = vadd.s32 %v265, %v271
    %vm274 = vc.u32 %v272, %v268
    %v275 = vsel %vm274, 1, 0
    %v276 = vadd.s32 %v272, %v268
    %v277 = vadd.s32 %v273, %v275
    %v278 = vadd.s32 %v277, %v267
    %v279 = vadd.s32 %v278, %v269
    %v280 = vmul.u32 %v235, %v226
    %v281 = vadd.s32 %v257, %v276
    %vm282 = vc.u32 %v257, %v276
    %v283 = vadd.s32 %v279, 1
    %v284 = vsel %vm282, %v283, %v279
    %v285 = vadd.s32 %v280, %v284
    %v286 = vadd.s32 %v285, 536870912
    %v287 = vshrl.u32 %v286, 30
    %v288 = vshll.u32 %v287, 30
    %v289 = vsub.s32 %v285, %v288
    %vm290 = vcmp.lt.s32.totalorder %v289, 0
    %v291 = vsub.s32 0, %v289
    %v292 = vsel %vm290, %v291, %v289
    %v293 = vclz %v292
    %v294 = vsub.s32 %v293, 2
    %vm295 = vcmp.gt.s32.totalorder 0, %v294
    %v296 = vsel %vm295, 0, %v294
    %v297 = vsub.s32 32, %v296
    %v298 = vshll.u32 %v289, %v296
    %v299 = vshrl.u32 %v281, %v297
    %v300 = vor.u32 %v298, %v299
    %v301 = vsub.s32 4294967266, %v296
    %v302 = vadd.s32 %v301, 127
    %v303 = vshll.u32 %v302, 23
    %v304 = vor.u32 4788187, %v303
    %v305 = vand.u32 2147483647, %v304
    %v307 = vcvt.s32.f32 %v300
    %v308 = vmul.f32 %v307, %v305
    %v309 = vxor.u32 %v308, 2147483648
    %v310 = vsel %vm189, %v309, %v308
    %v311 = vsub.s32 4, %v287
    %v312 = vsel %vm189, %v311, %v287
    %v313 = vsel %vm188, %v31, %v310
    %v314 = vsel %vm188, 0, %v312
    %v315 = vmul.f32 %v313, %v313
    %v316 = vmul.f32 %v315, -0.001358992
    %v317 = vadd.f32 %v316, 0.041655596
    %v318 = vmul.f32 %v315, %v317
    %v319 = vadd.f32 %v318, -0.4999988
    %v320 = vmul.f32 %v315, %v319
    %v321 = vadd.f32 1.0, %v320
    %v322 = vmul.f32 %v313, %v313
    %v323 = vmul.f32 %v322, -0.00019511016
    %v324 = vadd.f32 %v323, 0.008332121
    %v325 = vmul.f32 %v322, %v324
    %v326 = vadd.f32 %v325, -0.16666654
    %v327 = vmul.f32 %v322, %v326
    %v328 = vadd.f32 %v327, 1.0
    %v329 = vmul.f32 %v328, %v313
    %vm330 = vweird.f32 %v31
    %v331 = vadd.s32 %v314, 3
    %v332 = vand.u32 %v331, 3
    %vm333 = vcmp.lt.s32.totalorder %v332, 2
    %vm334 = vcmp.eq.s32.totalorder %v332, 0
    %v335 = vxor.u32 %v329, 2147483648
    %v336 = vsel %vm334, %v321, %v335
    %vm337 = vcmp.eq.s32.totalorder %v332, 2
    %v338 = vxor.u32 %v321, 2147483648
    %v339 = vsel %vm337, %v338, %v329
    %v340 = vsel %vm333, %v336, %v339
    %v341 = vsel %vm330, nan, %v340
    %342 = vst [vmem:[#allocation2] sm:$0xff] %v186
    %343 = vst [vmem:[#allocation2 + $0x10] sm:$0xff] %v341
    %344 = vset.pattern.permute.xlu0 0
    %345 = vperm.xlu0 %344, %v14
    %v346 = vpop.permute.xlu0 %345
    %348 = vset.pattern.permute.xlu0 0
    %349 = vperm.xlu0 %348, %v15
    %v350 = vpop.permute.xlu0 %349
    %v352 = vmul.f32 %v346, %v26
    %v353 = vmul.f32 %v350, %v26
    %v354 = vadd.f32 %v352, %v29
    %v355 = vadd.f32 %v353, %v29
    %v356 = vand.u32 2147483647, %v354
    %vm357 = vcmp.le.f32.partialorder %v356, 0.7853982
    %vm358 = vcmp.lt.s32.totalorder %v354, 0
    %v359 = vand.u32 %v354, 2139095040
    %v360 = vshrl.u32 %v359, 23
    %v361 = vsub.s32 %v360, 127
    %v362 = vand.u32 2147483647, %v354
    %v363 = vand.u32 %v362, 8388607
    %v364 = vor.u32 %v363, 8388608
    %v365 = vsub.s32 0, %v364
    %v366 = vadd.s32 %v361, 1
    %vm367 = vcmp.gt.s32.totalorder %v366, 0
    %v368 = vsel %vm367, %v366, 0
    %v369 = vshrl.u32 %v368, 5
    %v370 = vand.u32 %v368, 31
    %v371 = vsub.s32 32, %v370
    %v372 = vshrl.u32 683565275, %v371
    %v373 = vshll.u32 683565275, %v370
    %v374 = vshrl.u32 2475754826, %v371
    %v375 = vor.u32 %v373, %v374
    %v376 = vshll.u32 2475754826, %v370
    %v377 = vshrl.u32 2131351028, %v371
    %v378 = vor.u32 %v376, %v377
    %v379 = vshll.u32 2131351028, %v370
    %v380 = vshrl.u32 2102212464, %v371
    %v381 = vor.u32 %v379, %v380
    %v382 = vshll.u32 2102212464, %v370
    %v383 = vshrl.u32 920167782, %v371
    %v384 = vor.u32 %v382, %v383
    %v385 = vshll.u32 920167782, %v370
    %v386 = vshrl.u32 1326507024, %v371
    %v387 = vor.u32 %v385, %v386
    %vm388 = vcmp.lt.s32.totalorder %v369, 1
    %vm389 = vcmp.lt.s32.totalorder %v369, 2
    %vm390 = vcmp.lt.s32.totalorder %v369, 3
    %vm391 = vcmp.lt.s32.totalorder %v369, 4
    %v392 = vsel %vm388, %v372, %v375
    %v393 = vsel %vm391, %v381, 2102212464
    %v394 = vsel %vm390, %v378, %v393
    %v395 = vsel %vm389, %v392, %v394
    %v396 = vsel %vm388, %v375, %v378
    %v397 = vsel %vm391, %v384, 920167782
    %v398 = vsel %vm390, %v381, %v397
    %v399 = vsel %vm389, %v396, %v398
    %v400 = vsel %vm388, %v378, %v381
    %v401 = vsel %vm391, %v387, 1326507024
    %v402 = vsel %vm390, %v384, %v401
    %v403 = vsel %vm389, %v400, %v402
    %v404 = vshll.u32 %v364, 8
    %v405 = vand.u32 %v404, 65535
    %v406 = vshrl.u32 %v404, 16
    %v407 = vand.u32 %v403, 65535
    %v408 = vshrl.u32 %v403, 16
    %v409 = vmul.u32 %v405, %v407
    %v410 = vmul.u32 %v405, %v408
    %v411 = vmul.u32 %v406, %v407
    %v412 = vmul.u32 %v406, %v408
    %v413 = vshll.u32 %v410, 16
    %v414 = vshrl.u32 %v410, 16
    %v415 = vshll.u32 %v411, 16
    %v416 = vshrl.u32 %v411, 16
    %vm417 = vc.u32 %v409, %v413
    %v418 = vsel %vm417, 1, 0
    %v419 = vadd.s32 %v409, %v413
    %v420 = vadd.s32 %v412, %v418
    %vm421 = vc.u32 %v419, %v415
    %v422 = vsel %vm421, 1, 0
    %v423 = vadd.s32 %v419, %v415
    %v424 = vadd.s32 %v420, %v422
    %v425 = vadd.s32 %v424, %v414
    %v426 = vadd.s32 %v425, %v416
    %v427 = vand.u32 %v404, 65535
    %v428 = vshrl.u32 %v404, 16
    %v429 = vand.u32 %v399, 65535
    %v430 = vshrl.u32 %v399, 16
    %v431 = vmul.u32 %v427, %v429
    %v432 = vmul.u32 %v427, %v430
    %v433 = vmul.u32 %v428, %v429
    %v434 = vmul.u32 %v428, %v430
    %v435 = vshll.u32 %v432, 16
    %v436 = vshrl.u32 %v432, 16
    %v437 = vshll.u32 %v433, 16
    %v438 = vshrl.u32 %v433, 16
    %vm439 = vc.u32 %v431, %v435
    %v440 = vsel %vm439, 1, 0
    %v441 = vadd.s32 %v431, %v435
    %v442 = vadd.s32 %v434, %v440
    %vm443 = vc.u32 %v441, %v437
    %v444 = vsel %vm443, 1, 0
    %v445 = vadd.s32 %v441, %v437
    %v446 = vadd.s32 %v442, %v444
    %v447 = vadd.s32 %v446, %v436
    %v448 = vadd.s32 %v447, %v438
    %v449 = vmul.u32 %v404, %v395
    %v450 = vadd.s32 %v426, %v445
    %vm451 = vc.u32 %v426, %v445
    %v452 = vadd.s32 %v448, 1
    %v453 = vsel %vm451, %v452, %v448
    %v454 = vadd.s32 %v449, %v453
    %v455 = vadd.s32 %v454, 536870912
    %v456 = vshrl.u32 %v455, 30
    %v457 = vshll.u32 %v456, 30
    %v458 = vsub.s32 %v454, %v457
    %vm459 = vcmp.lt.s32.totalorder %v458, 0
    %v460 = vsub.s32 0, %v458
    %v461 = vsel %vm459, %v460, %v458
    %v462 = vclz %v461
    %v463 = vsub.s32 %v462, 2
    %vm464 = vcmp.gt.s32.totalorder 0, %v463
    %v465 = vsel %vm464, 0, %v463
    %v466 = vsub.s32 32, %v465
    %v467 = vshll.u32 %v458, %v465
    %v468 = vshrl.u32 %v450, %v466
    %v469 = vor.u32 %v467, %v468
    %v470 = vsub.s32 4294967266, %v465
    %v471 = vadd.s32 %v470, 127
    %v472 = vshll.u32 %v471, 23
    %v473 = vor.u32 4788187, %v472
    %v474 = vand.u32 2147483647, %v473
    %v476 = vcvt.s32.f32 %v469
    %v477 = vmul.f32 %v476, %v474
    %v478 = vxor.u32 %v477, 2147483648
    %v479 = vsel %vm358, %v478, %v477
    %v480 = vsub.s32 4, %v456
    %v481 = vsel %vm358, %v480, %v456
    %v482 = vsel %vm357, %v354, %v479
    %v483 = vsel %vm357, 0, %v481
    %v484 = vmul.f32 %v482, %v482
    %v485 = vmul.f32 %v484, -0.001358992
    %v486 = vadd.f32 %v485, 0.041655596
    %v487 = vmul.f32 %v484, %v486
    %v488 = vadd.f32 %v487, -0.4999988
    %v489 = vmul.f32 %v484, %v488
    %v490 = vadd.f32 1.0, %v489
    %v491 = vmul.f32 %v482, %v482
    %v492 = vmul.f32 %v491, -0.00019511016
    %v493 = vadd.f32 %v492, 0.008332121
    %v494 = vmul.f32 %v491, %v493
    %v495 = vadd.f32 %v494, -0.16666654
    %v496 = vmul.f32 %v491, %v495
    %v497 = vadd.f32 %v496, 1.0
    %v498 = vmul.f32 %v497, %v482
    %vm499 = vweird.f32 %v354
    %v500 = vadd.s32 %v483, 3
    %v501 = vand.u32 %v500, 3
    %vm502 = vcmp.lt.s32.totalorder %v501, 2
    %vm503 = vcmp.eq.s32.totalorder %v501, 0
    %v504 = vxor.u32 %v498, 2147483648
    %v505 = vsel %vm503, %v490, %v504
    %vm506 = vcmp.eq.s32.totalorder %v501, 2
    %v507 = vxor.u32 %v490, 2147483648
    %v508 = vsel %vm506, %v507, %v498
    %v509 = vsel %vm502, %v505, %v508
    %v510 = vsel %vm499, nan, %v509
    %v511 = vand.u32 2147483647, %v355
    %vm512 = vcmp.le.f32.partialorder %v511, 0.7853982
    %vm513 = vcmp.lt.s32.totalorder %v355, 0
    %v514 = vand.u32 %v355, 2139095040
    %v515 = vshrl.u32 %v514, 23
    %v516 = vsub.s32 %v515, 127
    %v517 = vand.u32 2147483647, %v355
    %v518 = vand.u32 %v517, 8388607
    %v519 = vor.u32 %v518, 8388608
    %v520 = vsub.s32 0, %v519
    %v521 = vadd.s32 %v516, 1
    %vm522 = vcmp.gt.s32.totalorder %v521, 0
    %v523 = vsel %vm522, %v521, 0
    %v524 = vshrl.u32 %v523, 5
    %v525 = vand.u32 %v523, 31
    %v526 = vsub.s32 32, %v525
    %v527 = vshrl.u32 683565275, %v526
    %v528 = vshll.u32 683565275, %v525
    %v529 = vshrl.u32 2475754826, %v526
    %v530 = vor.u32 %v528, %v529
    %v531 = vshll.u32 2475754826, %v525
    %v532 = vshrl.u32 2131351028, %v526
    %v533 = vor.u32 %v531, %v532
    %v534 = vshll.u32 2131351028, %v525
    %v535 = vshrl.u32 2102212464, %v526
    %v536 = vor.u32 %v534, %v535
    %v537 = vshll.u32 2102212464, %v525
    %v538 = vshrl.u32 920167782, %v526
    %v539 = vor.u32 %v537, %v538
    %v540 = vshll.u32 920167782, %v525
    %v541 = vshrl.u32 1326507024, %v526
    %v542 = vor.u32 %v540, %v541
    %vm543 = vcmp.lt.s32.totalorder %v524, 1
    %vm544 = vcmp.lt.s32.totalorder %v524, 2
    %vm545 = vcmp.lt.s32.totalorder %v524, 3
    %vm546 = vcmp.lt.s32.totalorder %v524, 4
    %v547 = vsel %vm543, %v527, %v530
    %v548 = vsel %vm546, %v536, 2102212464
    %v549 = vsel %vm545, %v533, %v548
    %v550 = vsel %vm544, %v547, %v549
    %v551 = vsel %vm543, %v530, %v533
    %v552 = vsel %vm546, %v539, 920167782
    %v553 = vsel %vm545, %v536, %v552
    %v554 = vsel %vm544, %v551, %v553
    %v555 = vsel %vm543, %v533, %v536
    %v556 = vsel %vm546, %v542, 1326507024
    %v557 = vsel %vm545, %v539, %v556
    %v558 = vsel %vm544, %v555, %v557
    %v559 = vshll.u32 %v519, 8
    %v560 = vand.u32 %v559, 65535
    %v561 = vshrl.u32 %v559, 16
    %v562 = vand.u32 %v558, 65535
    %v563 = vshrl.u32 %v558, 16
    %v564 = vmul.u32 %v560, %v562
    %v565 = vmul.u32 %v560, %v563
    %v566 = vmul.u32 %v561, %v562
    %v567 = vmul.u32 %v561, %v563
    %v568 = vshll.u32 %v565, 16
    %v569 = vshrl.u32 %v565, 16
    %v570 = vshll.u32 %v566, 16
    %v571 = vshrl.u32 %v566, 16
    %vm572 = vc.u32 %v564, %v568
    %v573 = vsel %vm572, 1, 0
    %v574 = vadd.s32 %v564, %v568
    %v575 = vadd.s32 %v567, %v573
    %vm576 = vc.u32 %v574, %v570
    %v577 = vsel %vm576, 1, 0
    %v578 = vadd.s32 %v574, %v570
    %v579 = vadd.s32 %v575, %v577
    %v580 = vadd.s32 %v579, %v569
    %v581 = vadd.s32 %v580, %v571
    %v582 = vand.u32 %v559, 65535
    %v583 = vshrl.u32 %v559, 16
    %v584 = vand.u32 %v554, 65535
    %v585 = vshrl.u32 %v554, 16
    %v586 = vmul.u32 %v582, %v584
    %v587 = vmul.u32 %v582, %v585
    %v588 = vmul.u32 %v583, %v584
    %v589 = vmul.u32 %v583, %v585
    %v590 = vshll.u32 %v587, 16
    %v591 = vshrl.u32 %v587, 16
    %v592 = vshll.u32 %v588, 16
    %v593 = vshrl.u32 %v588, 16
    %vm594 = vc.u32 %v586, %v590
    %v595 = vsel %vm594, 1, 0
    %v596 = vadd.s32 %v586, %v590
    %v597 = vadd.s32 %v589, %v595
    %vm598 = vc.u32 %v596, %v592
    %v599 = vsel %vm598, 1, 0
    %v600 = vadd.s32 %v596, %v592
    %v601 = vadd.s32 %v597, %v599
    %v602 = vadd.s32 %v601, %v591
    %v603 = vadd.s32 %v602, %v593
    %v604 = vmul.u32 %v559, %v550
    %v605 = vadd.s32 %v581, %v600
    %vm606 = vc.u32 %v581, %v600
    %v607 = vadd.s32 %v603, 1
    %v608 = vsel %vm606, %v607, %v603
    %v609 = vadd.s32 %v604, %v608
    %v610 = vadd.s32 %v609, 536870912
    %v611 = vshrl.u32 %v610, 30
    %v612 = vshll.u32 %v611, 30
    %v613 = vsub.s32 %v609, %v612
    %vm614 = vcmp.lt.s32.totalorder %v613, 0
    %v615 = vsub.s32 0, %v613
    %v616 = vsel %vm614, %v615, %v613
    %v617 = vclz %v616
    %v618 = vsub.s32 %v617, 2
    %vm619 = vcmp.gt.s32.totalorder 0, %v618
    %v620 = vsel %vm619, 0, %v618
    %v621 = vsub.s32 32, %v620
    %v622 = vshll.u32 %v613, %v620
    %v623 = vshrl.u32 %v605, %v621
    %v624 = vor.u32 %v622, %v623
    %v625 = vsub.s32 4294967266, %v620
    %v626 = vadd.s32 %v625, 127
    %v627 = vshll.u32 %v626, 23
    %v628 = vor.u32 4788187, %v627
    %v629 = vand.u32 2147483647, %v628
    %v631 = vcvt.s32.f32 %v624
    %v632 = vmul.f32 %v631, %v629
    %v633 = vxor.u32 %v632, 2147483648
    %v634 = vsel %vm513, %v633, %v632
    %v635 = vsub.s32 4, %v611
    %v636 = vsel %vm513, %v635, %v611
    %v637 = vsel %vm512, %v355, %v634
    %v638 = vsel %vm512, 0, %v636
    %v639 = vmul.f32 %v637, %v637
    %v640 = vmul.f32 %v639, -0.001358992
    %v641 = vadd.f32 %v640, 0.041655596
    %v642 = vmul.f32 %v639, %v641
    %v643 = vadd.f32 %v642, -0.4999988
    %v644 = vmul.f32 %v639, %v643
    %v645 = vadd.f32 1.0, %v644
    %v646 = vmul.f32 %v637, %v637
    %v647 = vmul.f32 %v646, -0.00019511016
    %v648 = vadd.f32 %v647, 0.008332121
    %v649 = vmul.f32 %v646, %v648
    %v650 = vadd.f32 %v649, -0.16666654
    %v651 = vmul.f32 %v646, %v650
    %v652 = vadd.f32 %v651, 1.0
    %v653 = vmul.f32 %v652, %v637
    %vm654 = vweird.f32 %v355
    %v655 = vadd.s32 %v638, 3
    %v656 = vand.u32 %v655, 3
    %vm657 = vcmp.lt.s32.totalorder %v656, 2
    %vm658 = vcmp.eq.s32.totalorder %v656, 0
    %v659 = vxor.u32 %v653, 2147483648
    %v660 = vsel %vm658, %v645, %v659
    %vm661 = vcmp.eq.s32.totalorder %v656, 2
    %v662 = vxor.u32 %v645, 2147483648
    %v663 = vsel %vm661, %v662, %v653
    %v664 = vsel %vm657, %v660, %v663
    %v665 = vsel %vm654, nan, %v664
    %666 = vst [vmem:[#allocation2 + $0x8] sm:$0xff] %v510
    %667 = vst [vmem:[#allocation2 + $0x18] sm:$0xff] %v665
    // Predicated region
    $region10: #{tpu_custom_call.1} parent=1 // pred_check
      _
    $region11: #{tpu_custom_call.1} parent=1 // pred_check_branch
      %669 = sbr.rel (0) target = $region13
    $region12: #{tpu_custom_call.1} parent=1 // pred_region
      %671 = vsyncadd [#allocation3], 0
      %s672 = sshll.u32 [#allocation2], 4
      %s673 = int_to_ptr.vmem [resolvable:$true] %s672
      %s674 = sshll.u32 %s2, 4
      %s675 = int_to_ptr.hbm [resolvable:$true] %s674
      %680 = dma.vmem_to_hbm [thread:$0]  %s673, 512, %s675, [#allocation3], 256, 256, 16
    $region13: #{tpu_custom_call.1} parent=1 // pred_fallthru
      _
    // Predicated region
    $region14: #{tpu_custom_call.1} parent=1 // pred_check
      _
    $region15: #{tpu_custom_call.1} parent=1 // pred_check_branch
      %682 = sbr.rel (0) target = $region17
    $region16: #{tpu_custom_call.1} parent=1 // pred_region
      %684 = dma.done [#allocation3], 512
    $region17: #{tpu_custom_call.1} parent=1 // pred_fallthru
      _
    %685 = vsyncpa [#allocation3], 1

</llo_original>
